<compile_context>
chip_gen: v7x
topology: tpu7x:2x2x1
jax: 0.10.0
libtpu: 0.0.40
codegen_flags: <defaults>
</compile_context>

<pallas_src>
import functools
import math

import jax
import jax.numpy as jnp
from jax.experimental import pallas as pl
from jax.experimental.pallas import tpu as pltpu

EPS = 1e-6


# ----------------------------- shared helpers -------------------------------
def _layer_norm(y, a, c):
    """PyTorch parity: a*(y-mean)/(std+eps)+b, std with ddof=1 (Bessel)."""
    d = y.shape[-1]
    mean = jnp.sum(y, axis=-1, keepdims=True) * (1.0 / d)
    yc = y - mean                                     # single centered temp
    var = jnp.sum(yc * yc, axis=-1, keepdims=True) * (1.0 / (d - 1))
    inv = pl.reciprocal(jnp.sqrt(var) + EPS, approx=False)   # exact, per row
    return yc * (a * inv) + c


def _mm(a, b, md):
    """(m,k)@(k,n) with md operands, f32 accumulation on the MXU."""
    return jax.lax.dot_general(
        a.astype(md), b.astype(md),
        dimension_numbers=(((1,), (0,)), ((), ())),
        preferred_element_type=jnp.float32)


def _mm_nt(a, b, md):
    """(m,k)x(n,k)->(m,n): contract last dims of BOTH operands (no transpose)."""
    return jax.lax.dot_general(
        a.astype(md), b.astype(md),
        dimension_numbers=(((1,), (1,)), ((), ())),
        preferred_element_type=jnp.float32)


# --------------- kernel 1: LN1 + packed Q/K/V projections -------------------
def _qkv_kernel(x_ref, a1_ref, c1_ref,
                wq_ref, bq_ref, wk_ref, bk_ref, wv_ref, bv_ref,
                q_ref, k_ref, v_ref, *, mm_dtype):
    xn = _layer_norm(x_ref[...].astype(jnp.float32), a1_ref[...], c1_ref[...])
    xn = xn.astype(mm_dtype)
    # All heads packed: N = H*dk = D fills the MXU columns.
    q_ref[...] = (_mm(xn, wq_ref[...], mm_dtype) + bq_ref[...]).astype(q_ref.dtype)
    k_ref[...] = (_mm(xn, wk_ref[...], mm_dtype) + bk_ref[...]).astype(k_ref.dtype)
    v_ref[...] = (_mm(xn, wv_ref[...], mm_dtype) + bv_ref[...]).astype(v_ref.dtype)


# -------- kernel 2: attention (online softmax) + output proj + FFN ----------
def _attn_ffn_kernel(x_ref, q_ref, k_ref, v_ref, bias_ref,
                     wo_ref, bo_ref, a2_ref, c2_ref,
                     w1_ref, b1_ref, w2_ref, b2_ref,
                     out_ref, ocat_ref,
                     *, num_heads, dk, kv_tile, mm_dtype):
    TQ = x_ref.shape[0]
    n_kv = k_ref.shape[1] // kv_tile

    # ---- sublayer 0: self-attention (Q/K/V precomputed by kernel 1) --------
    for h in range(num_heads):                       # static loop, H is small
        qh = q_ref[h]                                # (TQ, dk), Wq pre-scaled

        def kv_step(j, carry, _h=h):
            m, l, acc = carry
            start = pl.multiple_of(j * kv_tile, kv_tile)
            kj = k_ref[_h, pl.ds(start, kv_tile), :]   # (TKV, dk)
            vj = v_ref[_h, pl.ds(start, kv_tile), :]   # (TKV, dk)
            bj = bias_ref[pl.ds(j, 1), :]              # (1, TKV) additive mask
            s = _mm_nt(qh, kj, mm_dtype) + bj          # (TQ, TKV) f32 scores
            m_new = jnp.maximum(m, jnp.max(s, axis=-1, keepdims=True))
            alpha = jnp.exp(m - m_new)
            p = jnp.exp(s - m_new)
            l_new = alpha * l + jnp.sum(p, axis=-1, keepdims=True)
            acc_new = alpha * acc + _mm(p, vj, mm_dtype)
            return m_new, l_new, acc_new

        m0 = jnp.full((TQ, 1), -1e30, jnp.float32)
        l0 = jnp.zeros((TQ, 1), jnp.float32)
        a0 = jnp.zeros((TQ, dk), jnp.float32)
        m, l, acc = jax.lax.fori_loop(0, n_kv, kv_step, (m0, l0, a0),
                                      unroll=n_kv <= 4)
        oh = acc * pl.reciprocal(l, approx=True)     # (TQ, dk), normalized
        ocat_ref[:, h * dk:(h + 1) * dk] = oh        # pack heads -> (TQ, D)

    # Single packed output projection: full MXU K (=D) and N (=D).
    attn = _mm(ocat_ref[...], wo_ref[...], mm_dtype) + bo_ref[...]
    # TODO(synk): dropout omitted (inference / p treated as 0, deterministic)
    x1 = x_ref[...].astype(jnp.float32) + attn        # residual, (TQ, D)

    # ---- sublayer 1: feed-forward with pre-norm + residual -----------------
    xn2 = _layer_norm(x1, a2_ref[...], c2_ref[...])
    hdd = jnp.maximum(_mm(xn2, w1_ref[...], mm_dtype) + b1_ref[...], 0.0)
    ffn = _mm(hdd, w2_ref[...], mm_dtype) + b2_ref[...]
    out_ref[...] = (x1 + ffn).astype(out_ref.dtype)


# ------------------------------ wrapper --------------------------------------
def _round_up(x, m):
    return ((x + m - 1) // m) * m


def _pick_kv_tile(s_pad, tq, cap):
    for cand in (cap, 512, 256, 128):
        if 0 < cand <= s_pad and s_pad % cand == 0:
            return cand
    return tq                      # tq always divides s_pad by construction


def _default_vmem_limit_bytes():
    # Generation-aware: ~96 MiB on v5e/v6e (128 MiB VMEM), ~48 MiB on v7x (64 MiB).
    try:
        cap = int(pltpu.get_tpu_info().vmem_capacity_bytes)
    except Exception:
        cap = 64 * 1024 * 1024     # conservative fallback (smallest generation)
    return (cap * 3) // 4


def prepare_encoder_params(params, *, num_heads, matmul_dtype=jnp.bfloat16):
    """Cast / pre-scale weights ONCE; cache and reuse the result across calls."""
    D = params["wq"].shape[0]
    dk = D // num_heads
    scale = 1.0 / math.sqrt(dk)
    md = matmul_dtype
    f32 = jnp.float32

    def row(v):                    # biases / LN params as (1, N) f32
        return jnp.asarray(v, f32).reshape(1, -1)

    return {
        "ln1_a": row(params["ln1_a"]), "ln1_b": row(params["ln1_b"]),
        "ln2_a": row(params["ln2_a"]), "ln2_b": row(params["ln2_b"]),
        # 1/sqrt(dk) folded into the Q projection (zero in-kernel cost).
        "wq": (jnp.asarray(params["wq"], f32) * scale).astype(md),
        "bq": row(params["bq"]) * scale,
        "wk": jnp.asarray(params["wk"]).astype(md), "bk": row(params["bk"]),
        "wv": jnp.asarray(params["wv"]).astype(md), "bv": row(params["bv"]),
        "wo": jnp.asarray(params["wo"]).astype(md), "bo": row(params["bo"]),
        "w1": jnp.asarray(params["w1"]).astype(md), "bf1": row(params["bf1"]),
        "w2": jnp.asarray(params["w2"]).astype(md), "bf2": row(params["bf2"]),
    }


def encoder_layer(x, mask, prepared, *, num_heads,
                  matmul_dtype=jnp.bfloat16, q_tile=256, kv_tile=512,
                  vmem_limit_bytes=None, weight_buffer_count=None):
    B, S, D = x.shape
    dk = D // num_heads
    md = matmul_dtype
    p = prepared

    # Query tile / sequence padding (padded keys are masked via the bias).
    TQ = max(8, min(_round_up(q_tile, 8), _round_up(S, 8)))
    S_pad = _round_up(S, TQ)
    n_qt = S_pad // TQ
    TKV = _pick_kv_tile(S_pad, TQ, _round_up(kv_tile, 8))
    n_kv = S_pad // TKV

    if vmem_limit_bytes is None:
        vmem_limit_bytes = _default_vmem_limit_bytes()
    cparams = pltpu.CompilerParams(
        dimension_semantics=("parallel", "parallel"),
        vmem_limit_bytes=vmem_limit_bytes)

    # Constant-index param blocks stay VMEM-resident across grid steps.  On
    # v7x pass weight_buffer_count=1 to single-buffer them (halves weight VMEM).
    def const_spec(arr):
        nd = arr.ndim
        kw = {}
        if weight_buffer_count is not None:
            kw["pipeline_mode"] = pl.Buffered(weight_buffer_count)
        return pl.BlockSpec(arr.shape, lambda b, i, _nd=nd: (0,) * _nd, **kw)

    # Pad the sequence axis; int mask -> additive f32 bias, blocked along KV.
    x_p = jnp.pad(x, ((0, 0), (0, S_pad - S), (0, 0))) if S_pad != S else x
    bias = jnp.where(mask.reshape(B, S) == 0, jnp.float32(-1e9), jnp.float32(0.0))
    if S_pad != S:
        bias = jnp.pad(bias, ((0, 0), (0, S_pad - S)), constant_values=-1e9)
    bias = bias.reshape(B, n_kv, TKV)

    # ---- kernel 1: LN1 + packed Q/K/V projections (once per token) ---------
    qkv_params = (p["ln1_a"], p["ln1_b"], p["wq"], p["bq"],
                  p["wk"], p["bk"], p["wv"], p["bv"])
    qkv_out = jax.ShapeDtypeStruct((B, S_pad, D), md)
    q, k, v = pl.pallas_call(
        functools.partial(_qkv_kernel, mm_dtype=md),
        out_shape=(qkv_out, qkv_out, qkv_out),
        grid_spec=pltpu.PrefetchScalarGridSpec(
            num_scalar_prefetch=0,
            grid=(B, n_qt),
            in_specs=[pl.BlockSpec((None, TQ, D), lambda b, i: (b, i, 0))]
                     + [const_spec(a) for a in qkv_params],
            out_specs=(pl.BlockSpec((None, TQ, D), lambda b, i: (b, i, 0)),
                       pl.BlockSpec((None, TQ, D), lambda b, i: (b, i, 0)),
                       pl.BlockSpec((None, TQ, D), lambda b, i: (b, i, 0))),
        ),
        compiler_params=cparams,
    )(x_p, *qkv_params)

    # Head-major (B, H, S, dk) views: one cheap XLA transpose per call so the
    # attention kernel slices heads along leading (free) dimensions.
    def to_heads(t):
        return t.reshape(B, S_pad, num_heads, dk).transpose(0, 2, 1, 3)
    qh, kh, vh = to_heads(q), to_heads(k), to_heads(v)

    # ---- kernel 2: attention + output projection + FFN ---------------------
    attn_params = (p["wo"], p["bo"], p["ln2_a"], p["ln2_b"],
                   p["w1"], p["bf1"], p["w2"], p["bf2"])
    out = pl.pallas_call(
        functools.partial(_attn_ffn_kernel, num_heads=num_heads, dk=dk,
                          kv_tile=TKV, mm_dtype=md),
        out_shape=jax.ShapeDtypeStruct((B, S_pad, D), x.dtype),
        grid_spec=pltpu.PrefetchScalarGridSpec(
            num_scalar_prefetch=0,
            grid=(B, n_qt),
            in_specs=[
                pl.BlockSpec((None, TQ, D), lambda b, i: (b, i, 0)),      # x
                pl.BlockSpec((None, num_heads, TQ, dk),
                             lambda b, i: (b, 0, i, 0)),                  # Q
                pl.BlockSpec((None, num_heads, S_pad, dk),
                             lambda b, i: (b, 0, 0, 0)),                  # K
                pl.BlockSpec((None, num_heads, S_pad, dk),
                             lambda b, i: (b, 0, 0, 0)),                  # V
                pl.BlockSpec((None, n_kv, TKV), lambda b, i: (b, 0, 0)),  # bias
            ] + [const_spec(a) for a in attn_params],
            out_specs=pl.BlockSpec((None, TQ, D), lambda b, i: (b, i, 0)),
            scratch_shapes=[pltpu.VMEM((TQ, D), jnp.float32)],            # packed heads
        ),
        compiler_params=cparams,
    )(x_p, qh, kh, vh, bias, *attn_params)

    return out[:, :S, :] if S_pad != S else out


# ----------------------------- pure-JAX reference ---------------------------
def reference(x, mask, params, *, num_heads):
    B, S, D = x.shape
    dk = D // num_heads

    def ln(y, a, c):
        mean = jnp.mean(y, -1, keepdims=True)
        std = jnp.sqrt(jnp.sum((y - mean) ** 2, -1, keepdims=True) / (D - 1))
        return a * (y - mean) / (std + EPS) + c

    xn = ln(x, params["ln1_a"], params["ln1_b"])
    q = xn @ params["wq"] + params["bq"]
    k = xn @ params["wk"] + params["bk"]
    v = xn @ params["wv"] + params["bv"]
    q = q.reshape(B, S, num_heads, dk).transpose(0, 2, 1, 3)
    k = k.reshape(B, S, num_heads, dk).transpose(0, 2, 1, 3)
    v = v.reshape(B, S, num_heads, dk).transpose(0, 2, 1, 3)
    scores = jnp.einsum("bhqd,bhkd->bhqk", q, k) / jnp.sqrt(jnp.float32(dk))
    scores = jnp.where(mask[:, None, :, :] == 0, -1e9, scores)
    p = jax.nn.softmax(scores, axis=-1)
    attn = jnp.einsum("bhqk,bhkd->bhqd", p, v).transpose(0, 2, 1, 3).reshape(B, S, D)
    attn = attn @ params["wo"] + params["bo"]
    x1 = x + attn
    xn2 = ln(x1, params["ln2_a"], params["ln2_b"])
    ffn = jnp.maximum(xn2 @ params["w1"] + params["bf1"], 0.0) @ params["w2"] + params["bf2"]
    return x1 + ffn


if __name__ == "__main__":
    B, S, D, H, DFF = 2, 8, 32, 4, 64

    key = jax.random.PRNGKey(0)
    ks = jax.random.split(key, 16)

    def w(k, shape, scale=0.1):
        return (scale * jax.random.normal(k, shape)).astype(jnp.float32)

    params = {
        "ln1_a": jnp.ones((1, D), jnp.float32),
        "ln1_b": jnp.zeros((1, D), jnp.float32),
        "ln2_a": jnp.ones((1, D), jnp.float32),
        "ln2_b": jnp.zeros((1, D), jnp.float32),
        "wq": w(ks[0], (D, D)), "bq": w(ks[1], (1, D)),
        "wk": w(ks[2], (D, D)), "bk": w(ks[3], (1, D)),
        "wv": w(ks[4], (D, D)), "bv": w(ks[5], (1, D)),
        "wo": w(ks[6], (D, D)), "bo": w(ks[7], (1, D)),
        "w1": w(ks[8], (D, DFF)), "bf1": w(ks[9], (1, DFF)),
        "w2": w(ks[10], (DFF, D)), "bf2": w(ks[11], (1, D)),
    }

    x = jax.random.normal(ks[12], (B, S, D), jnp.float32)
    # mask: (B, 1, S) int32; mask out the last two key positions of batch 1
    mask = jnp.ones((B, 1, S), jnp.int32)
    mask = mask.at[1, 0, -2:].set(0)

    ref = reference(x, mask, params, num_heads=H)

    # f32-operand path: near-parity with the f32 reference (approx-reciprocal
    # softmax norm + scale-folded Wq account for the 2e-3 tolerance).
    prep32 = prepare_encoder_params(params, num_heads=H, matmul_dtype=jnp.float32)
    out32 = jax.block_until_ready(
        encoder_layer(x, mask, prep32, num_heads=H, matmul_dtype=jnp.float32))
    assert out32.shape == (B, S, D)
    err32 = float(jnp.max(jnp.abs(out32 - ref)))
    assert jnp.allclose(out32, ref, rtol=2e-3, atol=2e-3), err32

    # bf16-operand path (the default on all generations): f32 accumulation,
    # looser tolerance from bf16-quantized weights/activations.
    prep16 = prepare_encoder_params(params, num_heads=H)
    out16 = jax.block_until_ready(encoder_layer(x, mask, prep16, num_heads=H))
    assert out16.shape == (B, S, D)
    err16 = float(jnp.max(jnp.abs(out16 - ref)))
    assert jnp.allclose(out16, ref, rtol=4e-2, atol=4e-2), err16

    print("KERNEL_OK")
</pallas_src>

<mosaic_0001>
module attributes {stable_mosaic.version = 11 : i64} {
  func.func @_qkv_kernel(%arg0: i32, %arg1: i32, %arg2: memref<1x8x32xf32, #tpu.memory_space<vmem>>, %arg3: memref<1x32xf32, #tpu.memory_space<vmem>>, %arg4: memref<1x32xf32, #tpu.memory_space<vmem>>, %arg5: memref<32x32xf32, #tpu.memory_space<vmem>>, %arg6: memref<1x32xf32, #tpu.memory_space<vmem>>, %arg7: memref<32x32xf32, #tpu.memory_space<vmem>>, %arg8: memref<1x32xf32, #tpu.memory_space<vmem>>, %arg9: memref<32x32xf32, #tpu.memory_space<vmem>>, %arg10: memref<1x32xf32, #tpu.memory_space<vmem>>, %arg11: memref<1x8x32xf32, #tpu.memory_space<vmem>>, %arg12: memref<1x8x32xf32, #tpu.memory_space<vmem>>, %arg13: memref<1x8x32xf32, #tpu.memory_space<vmem>>) attributes {dimension_semantics = [#tpu.dimension_semantics<parallel>, #tpu.dimension_semantics<parallel>], iteration_bounds = array<i64: 2, 1>, scalar_prefetch = 0 : i64, scratch_operands = 0 : i64, tpu.core_type = #tpu.core_type<tc>, window_params = [{transform_indices = @transform_0, window_bounds = array<i64: 1, 8, 32>}, {pipeline_mode = #tpu.pipeline_mode<synchronous>, transform_indices = @transform_1, window_bounds = array<i64: 1, 32>}, {pipeline_mode = #tpu.pipeline_mode<synchronous>, transform_indices = @transform_2, window_bounds = array<i64: 1, 32>}, {pipeline_mode = #tpu.pipeline_mode<synchronous>, transform_indices = @transform_3, window_bounds = array<i64: 32, 32>}, {pipeline_mode = #tpu.pipeline_mode<synchronous>, transform_indices = @transform_4, window_bounds = array<i64: 1, 32>}, {pipeline_mode = #tpu.pipeline_mode<synchronous>, transform_indices = @transform_5, window_bounds = array<i64: 32, 32>}, {pipeline_mode = #tpu.pipeline_mode<synchronous>, transform_indices = @transform_6, window_bounds = array<i64: 1, 32>}, {pipeline_mode = #tpu.pipeline_mode<synchronous>, transform_indices = @transform_7, window_bounds = array<i64: 32, 32>}, {pipeline_mode = #tpu.pipeline_mode<synchronous>, transform_indices = @transform_8, window_bounds = array<i64: 1, 32>}, {transform_indices = @transform_9, window_bounds = array<i64: 1, 8, 32>}, {transform_indices = @transform_10, window_bounds = array<i64: 1, 8, 32>}, {transform_indices = @transform_11, window_bounds = array<i64: 1, 8, 32>}]} {
    %c0 = arith.constant 0 : index
    %c0_0 = arith.constant 0 : index
    %c0_1 = arith.constant 0 : index
    %0 = vector.load %arg2[%c0, %c0_0, %c0_1] : memref<1x8x32xf32, #tpu.memory_space<vmem>>, vector<1x8x32xf32>
    %1 = vector.shape_cast %0 : vector<1x8x32xf32> to vector<8x32xf32>
    %c0_2 = arith.constant 0 : index
    %c0_3 = arith.constant 0 : index
    %2 = vector.load %arg3[%c0_2, %c0_3] : memref<1x32xf32, #tpu.memory_space<vmem>>, vector<1x32xf32>
    %c0_4 = arith.constant 0 : index
    %c0_5 = arith.constant 0 : index
    %3 = vector.load %arg4[%c0_4, %c0_5] : memref<1x32xf32, #tpu.memory_space<vmem>>, vector<1x32xf32>
    %cst = arith.constant dense<0.000000e+00> : vector<8xf32>
    %4 = vector.multi_reduction <add>, %1, %cst [1] : vector<8x32xf32> to vector<8xf32>
    %5 = vector.shape_cast %4 : vector<8xf32> to vector<8x1xf32>
    %cst_6 = arith.constant 3.125000e-02 : f32
    %6 = vector.broadcast %cst_6 : f32 to vector<8x1xf32>
    %7 = arith.mulf %5, %6 : vector<8x1xf32>
    %8 = vector.broadcast %7 : vector<8x1xf32> to vector<8x32xf32>
    %9 = arith.subf %1, %8 : vector<8x32xf32>
    %10 = arith.mulf %9, %9 : vector<8x32xf32>
    %cst_7 = arith.constant dense<0.000000e+00> : vector<8xf32>
    %11 = vector.multi_reduction <add>, %10, %cst_7 [1] : vector<8x32xf32> to vector<8xf32>
    %12 = vector.shape_cast %11 : vector<8xf32> to vector<8x1xf32>
    %cst_8 = arith.constant 0.0322580636 : f32
    %13 = vector.broadcast %cst_8 : f32 to vector<8x1xf32>
    %14 = arith.mulf %12, %13 : vector<8x1xf32>
    %15 = math.sqrt %14 : vector<8x1xf32>
    %cst_9 = arith.constant 9.99999997E-7 : f32
    %16 = vector.broadcast %cst_9 : f32 to vector<8x1xf32>
    %17 = arith.addf %15, %16 : vector<8x1xf32>
    %18 = tpu.reciprocal %17 : vector<8x1xf32> -> vector<8x1xf32>
    %19 = vector.broadcast %2 : vector<1x32xf32> to vector<8x32xf32>
    %20 = vector.broadcast %18 : vector<8x1xf32> to vector<8x32xf32>
    %21 = arith.mulf %19, %20 : vector<8x32xf32>
    %22 = arith.mulf %9, %21 : vector<8x32xf32>
    %23 = vector.broadcast %3 : vector<1x32xf32> to vector<8x32xf32>
    %24 = arith.addf %22, %23 : vector<8x32xf32>
    %c0_10 = arith.constant 0 : index
    %c0_11 = arith.constant 0 : index
    %25 = vector.load %arg5[%c0_10, %c0_11] : memref<32x32xf32, #tpu.memory_space<vmem>>, vector<32x32xf32>
    %cst_12 = arith.constant dense<0.000000e+00> : vector<8x32xf32>
    %26 = tpu.matmul %24, %25, %cst_12 {dimension_numbers = #tpu.dot_dimension_numbers<[1], [0], [0], [1], [0, 0, 1, 1], [], []>} : vector<8x32xf32>, vector<32x32xf32>, vector<8x32xf32> -> vector<8x32xf32>
    %c0_13 = arith.constant 0 : index
    %c0_14 = arith.constant 0 : index
    %27 = vector.load %arg6[%c0_13, %c0_14] : memref<1x32xf32, #tpu.memory_space<vmem>>, vector<1x32xf32>
    %28 = vector.broadcast %27 : vector<1x32xf32> to vector<8x32xf32>
    %29 = arith.addf %26, %28 : vector<8x32xf32>
    %c0_15 = arith.constant 0 : index
    %c0_16 = arith.constant 0 : index
    %c0_17 = arith.constant 0 : index
    %30 = vector.load %arg11[%c0_15, %c0_16, %c0_17] : memref<1x8x32xf32, #tpu.memory_space<vmem>>, vector<1x8x32xf32>
    %31 = vector.shape_cast %30 : vector<1x8x32xf32> to vector<8x32xf32>
    %32 = vector.shape_cast %29 : vector<8x32xf32> to vector<1x8x32xf32>
    tpu.vector_store %arg11[%c0_15, %c0_16, %c0_17], %32 {strides = array<i32>} : memref<1x8x32xf32, #tpu.memory_space<vmem>>, vector<1x8x32xf32>,
    %c0_18 = arith.constant 0 : index
    %c0_19 = arith.constant 0 : index
    %33 = vector.load %arg7[%c0_18, %c0_19] : memref<32x32xf32, #tpu.memory_space<vmem>>, vector<32x32xf32>
    %cst_20 = arith.constant dense<0.000000e+00> : vector<8x32xf32>
    %34 = tpu.matmul %24, %33, %cst_20 {dimension_numbers = #tpu.dot_dimension_numbers<[1], [0], [0], [1], [0, 0, 1, 1], [], []>} : vector<8x32xf32>, vector<32x32xf32>, vector<8x32xf32> -> vector<8x32xf32>
    %c0_21 = arith.constant 0 : index
    %c0_22 = arith.constant 0 : index
    %35 = vector.load %arg8[%c0_21, %c0_22] : memref<1x32xf32, #tpu.memory_space<vmem>>, vector<1x32xf32>
    %36 = vector.broadcast %35 : vector<1x32xf32> to vector<8x32xf32>
    %37 = arith.addf %34, %36 : vector<8x32xf32>
    %c0_23 = arith.constant 0 : index
    %c0_24 = arith.constant 0 : index
    %c0_25 = arith.constant 0 : index
    %38 = vector.load %arg12[%c0_23, %c0_24, %c0_25] : memref<1x8x32xf32, #tpu.memory_space<vmem>>, vector<1x8x32xf32>
    %39 = vector.shape_cast %38 : vector<1x8x32xf32> to vector<8x32xf32>
    %40 = vector.shape_cast %37 : vector<8x32xf32> to vector<1x8x32xf32>
    tpu.vector_store %arg12[%c0_23, %c0_24, %c0_25], %40 {strides = array<i32>} : memref<1x8x32xf32, #tpu.memory_space<vmem>>, vector<1x8x32xf32>,
    %c0_26 = arith.constant 0 : index
    %c0_27 = arith.constant 0 : index
    %41 = vector.load %arg9[%c0_26, %c0_27] : memref<32x32xf32, #tpu.memory_space<vmem>>, vector<32x32xf32>
    %cst_28 = arith.constant dense<0.000000e+00> : vector<8x32xf32>
    %42 = tpu.matmul %24, %41, %cst_28 {dimension_numbers = #tpu.dot_dimension_numbers<[1], [0], [0], [1], [0, 0, 1, 1], [], []>} : vector<8x32xf32>, vector<32x32xf32>, vector<8x32xf32> -> vector<8x32xf32>
    %c0_29 = arith.constant 0 : index
    %c0_30 = arith.constant 0 : index
    %43 = vector.load %arg10[%c0_29, %c0_30] : memref<1x32xf32, #tpu.memory_space<vmem>>, vector<1x32xf32>
    %44 = vector.broadcast %43 : vector<1x32xf32> to vector<8x32xf32>
    %45 = arith.addf %42, %44 : vector<8x32xf32>
    %c0_31 = arith.constant 0 : index
    %c0_32 = arith.constant 0 : index
    %c0_33 = arith.constant 0 : index
    %46 = vector.load %arg13[%c0_31, %c0_32, %c0_33] : memref<1x8x32xf32, #tpu.memory_space<vmem>>, vector<1x8x32xf32>
    %47 = vector.shape_cast %46 : vector<1x8x32xf32> to vector<8x32xf32>
    %48 = vector.shape_cast %45 : vector<8x32xf32> to vector<1x8x32xf32>
    tpu.vector_store %arg13[%c0_31, %c0_32, %c0_33], %48 {strides = array<i32>} : memref<1x8x32xf32, #tpu.memory_space<vmem>>, vector<1x8x32xf32>,
    return
  }
  func.func @transform_0(%arg0: i32, %arg1: i32) -> (i32, i32, i32) {
    %c0_i32 = arith.constant 0 : i32
    %c0_i32_0 = arith.constant 0 : i32
    return %arg0, %arg1, %c0_i32 : i32, i32, i32
  }
  func.func @transform_1(%arg0: i32, %arg1: i32) -> (i32, i32) {
    %c0_i32 = arith.constant 0 : i32
    %c0_i32_0 = arith.constant 0 : i32
    %c0_i32_1 = arith.constant 0 : i32
    return %c0_i32, %c0_i32_0 : i32, i32
  }
  func.func @transform_2(%arg0: i32, %arg1: i32) -> (i32, i32) {
    %c0_i32 = arith.constant 0 : i32
    %c0_i32_0 = arith.constant 0 : i32
    %c0_i32_1 = arith.constant 0 : i32
    return %c0_i32, %c0_i32_0 : i32, i32
  }
  func.func @transform_3(%arg0: i32, %arg1: i32) -> (i32, i32) {
    %c0_i32 = arith.constant 0 : i32
    %c0_i32_0 = arith.constant 0 : i32
    %c0_i32_1 = arith.constant 0 : i32
    return %c0_i32, %c0_i32_0 : i32, i32
  }
  func.func @transform_4(%arg0: i32, %arg1: i32) -> (i32, i32) {
    %c0_i32 = arith.constant 0 : i32
    %c0_i32_0 = arith.constant 0 : i32
    %c0_i32_1 = arith.constant 0 : i32
    return %c0_i32, %c0_i32_0 : i32, i32
  }
  func.func @transform_5(%arg0: i32, %arg1: i32) -> (i32, i32) {
    %c0_i32 = arith.constant 0 : i32
    %c0_i32_0 = arith.constant 0 : i32
    %c0_i32_1 = arith.constant 0 : i32
    return %c0_i32, %c0_i32_0 : i32, i32
  }
  func.func @transform_6(%arg0: i32, %arg1: i32) -> (i32, i32) {
    %c0_i32 = arith.constant 0 : i32
    %c0_i32_0 = arith.constant 0 : i32
    %c0_i32_1 = arith.constant 0 : i32
    return %c0_i32, %c0_i32_0 : i32, i32
  }
  func.func @transform_7(%arg0: i32, %arg1: i32) -> (i32, i32) {
    %c0_i32 = arith.constant 0 : i32
    %c0_i32_0 = arith.constant 0 : i32
    %c0_i32_1 = arith.constant 0 : i32
    return %c0_i32, %c0_i32_0 : i32, i32
  }
  func.func @transform_8(%arg0: i32, %arg1: i32) -> (i32, i32) {
    %c0_i32 = arith.constant 0 : i32
    %c0_i32_0 = arith.constant 0 : i32
    %c0_i32_1 = arith.constant 0 : i32
    return %c0_i32, %c0_i32_0 : i32, i32
  }
  func.func @transform_9(%arg0: i32, %arg1: i32) -> (i32, i32, i32) {
    %c0_i32 = arith.constant 0 : i32
    %c0_i32_0 = arith.constant 0 : i32
    return %arg0, %arg1, %c0_i32 : i32, i32, i32
  }
  func.func @transform_10(%arg0: i32, %arg1: i32) -> (i32, i32, i32) {
    %c0_i32 = arith.constant 0 : i32
    %c0_i32_0 = arith.constant 0 : i32
    return %arg0, %arg1, %c0_i32 : i32, i32, i32
  }
  func.func @transform_11(%arg0: i32, %arg1: i32) -> (i32, i32, i32) {
    %c0_i32 = arith.constant 0 : i32
    %c0_i32_0 = arith.constant 0 : i32
    return %arg0, %arg1, %c0_i32 : i32, i32, i32
  }
}

</mosaic_0001>

<llo_original>
// kernel: tpu_custom_call.1
$region0: #{tpu_custom_call.1}
  #allocation0 [shape = 'u32[]', space=smem, size = 0x4, offset = 0x4, fixed_abs, tag = 'smem constant byte address 0x4 - core index']
  #allocation1 [shape = 'u32[144,128]{1,0:T(1,128)}', space=vmem, size = 0x12000, scoped, tag = 'internal scratch']
  %s0 = inlined_call_operand.hbm [shape: f32[2,8,32], index: 0, kind: input, shape index: {}]
  %s1 = inlined_call_operand.vmem [shape: f32[1,32], index: 1, kind: input, shape index: {}]
  %s2 = inlined_call_operand.vmem [shape: f32[1,32], index: 2, kind: input, shape index: {}]
  %s3 = inlined_call_operand.hbm [shape: f32[32,32], index: 3, kind: input, shape index: {}]
  %s4 = inlined_call_operand.vmem [shape: f32[1,32], index: 4, kind: input, shape index: {}]
  %s5 = inlined_call_operand.hbm [shape: f32[32,32], index: 5, kind: input, shape index: {}]
  %s6 = inlined_call_operand.vmem [shape: f32[1,32], index: 6, kind: input, shape index: {}]
  %s7 = inlined_call_operand.hbm [shape: f32[32,32], index: 7, kind: input, shape index: {}]
  %s8 = inlined_call_operand.vmem [shape: f32[1,32], index: 8, kind: input, shape index: {}]
  %s9 = inlined_call_operand.hbm [shape: f32[2,8,32], index: 9, kind: output, shape index: {0}]
  %s10 = inlined_call_operand.hbm [shape: f32[2,8,32], index: 10, kind: output, shape index: {1}]
  %s11 = inlined_call_operand.hbm [shape: f32[2,8,32], index: 11, kind: output, shape index: {2}]
  %12 = xla_tuple %s9, %s10, %s11
  %s13 = sld [smem:[#allocation0]]
  $region101: #{tpu_custom_call.1} parent=0
    _
  %s15 = ssub.s32 1, %s13
  %s16 = scalar_select 0, %s15, %s13
  $region1: #{tpu_custom_call.1} parent=0
    #allocation2 [shape = 'u8[8192]{0}', space=vmem, size = 0x2000, scoped, tag = 'input window, operand 0']
    #allocation3 [shape = 's32[2]{0}', space=sflag, size = 0x8, scoped, tag = 'scoped memory for tpu_custom_call.1']
    #allocation4 [shape = 's32[2]{0}', space=sflag, size = 0x8, scoped, tag = 'scoped memory for tpu_custom_call.1']
    #allocation5 [shape = 'u8[16384]{0}', space=vmem, size = 0x4000, scoped, tag = 'input window, operand 3, single buffered']
    #allocation6 [shape = 's32[1]{0}', space=sflag, size = 0x4, scoped, tag = 'scoped memory for tpu_custom_call.1']
    #allocation7 [shape = 'u8[16384]{0}', space=vmem, size = 0x4000, scoped, tag = 'input window, operand 5, single buffered']
    #allocation8 [shape = 'u8[16384]{0}', space=vmem, size = 0x4000, scoped, tag = 'input window, operand 7, single buffered']
    #allocation9 [shape = 's32[1]{0}', space=sflag, size = 0x4, scoped, tag = 'scoped memory for tpu_custom_call.1']
    #allocation10 [shape = 'u8[8192]{0}', space=vmem, size = 0x2000, scoped, tag = 'output window, operand 0']
    #allocation11 [shape = 'u8[8192]{0}', space=vmem, size = 0x2000, scoped, tag = 'output window, operand 1']
    #allocation12 [shape = 's32[2]{0}', space=sflag, size = 0x8, scoped, tag = 'scoped memory for tpu_custom_call.1']
    #allocation13 [shape = 'u8[8192]{0}', space=vmem, size = 0x2000, scoped, tag = 'output window, operand 2']
    %17 = vsyncpa [#allocation3], 0
    %s18 = scalar_lea.sflag [#allocation3], 1
    %19 = vsyncpa %s18, 0
    %20 = vsyncpa [#allocation6], 0
    %21 = vsyncpa [#allocation9], 0
    %22 = vsyncpa [#allocation4], 0
    %s23 = scalar_lea.sflag [#allocation4], 1
    %24 = vsyncpa %s23, 0
    %25 = vsyncpa [#allocation12], 0
    %s26 = scalar_lea.sflag [#allocation12], 1
    %27 = vsyncpa %s26, 0
    loop: start=0, step=1, limit=4
    $region2: #{tpu_custom_call.1} parent=1 // loop_pre_header
      _
    $region3: #{tpu_custom_call.1} parent=1 // loop_header
      %s29 = sphi 0, %s33
      %p30 = scmp.ge.s32.totalorder %s29, 4
      %s36 = sphi 0, %s48
      %s37 = sphi 0, %s44
      %s38 = sphi 0, %s36
      %s39 = sphi 0, %s37
      %s40 = sphi 0, %s38
      %s41 = sphi 0, %s39
      %s53 = sphi 0, %s55
      %s56 = sphi 0, %s53
      %s57 = sphi 0, %s56
      %s73 = sphi 0, %s57
      %s77 = sphi 0, %s77
      %s79 = sphi 0, %s77
      %s80 = sphi 0, %s79
      %s94 = sphi 0, %s80
      %s98 = sphi 0, %s98
      %s100 = sphi 0, %s98
      %s101 = sphi 0, %s100
      %s115 = sphi 0, %s101
      %s119 = sphi 0, %s119
      %s121 = sphi 0, %s119
      %s122 = sphi 0, %s121
      %s136 = sphi 0, %s122
      %s140 = sphi 0, %s140
      %s142 = sphi 0, %s140
      %s143 = sphi 0, %s142
      %s157 = sphi 0, %s143
      %s161 = sphi 0, %s161
      %s163 = sphi 0, %s161
      %s164 = sphi 0, %s163
      %s178 = sphi 0, %s164
      %s182 = sphi 0, %s182
      %s184 = sphi 0, %s182
      %s185 = sphi 0, %s184
      %s199 = sphi 0, %s185
      %s203 = sphi 0, %s203
      %s205 = sphi 0, %s203
      %s206 = sphi 0, %s205
      %s220 = sphi 0, %s206
      %s224 = sphi 0, %s224
      %s226 = sphi 0, %s224
      %s227 = sphi 0, %s226
      %s241 = sphi 0, %s227
      %s249 = sphi 0, %s251
      %s252 = sphi 0, %s249
      %s253 = sphi 0, %s252
      %s269 = sphi 0, %s253
      %s277 = sphi 0, %s279
      %s280 = sphi 0, %s277
      %s281 = sphi 0, %s280
      %s297 = sphi 0, %s281
      %s305 = sphi 0, %s307
      %s308 = sphi 0, %s305
      %s309 = sphi 0, %s308
      %s325 = sphi 0, %s309
    $region4: #{tpu_custom_call.1} parent=1 // loop_header_branch
      %32 = sbr.rel (%p30) target = $region8
    $region5: #{tpu_custom_call.1} parent=1 // loop_body
      %s34 = ssub.s32 %s29, 1
      %s35 = ssub.s32 %s29, 2
      %s42 = sadd.s32 1, %s37
      %p43 = scmp.ge.s32.totalorder %s42, 1
      %s44 = scalar_select %p43, 0, %s42
      %s45 = sadd.s32 1, %s36
      %s46 = scalar_select %p43, %s45, %s36
      %p47 = scmp.ge.s32.totalorder %s46, 2
      %s48 = scalar_select %p47, 0, %s46
      %s49 = ssub.s32 %s36, %s48
      %s50 = ssub.s32 %s37, %s44
      %s51 = sor.u32 %s49, %s50
      %p52 = scmp.eq.s32.totalorder %s51, 0
      %s54 = sadd.s32 %s53, 1
      %s55 = scalar_select %p52, %s53, %s54
      %p58 = pneg %p52
      %p59 = scmp.eq.s32.totalorder %s29, 1
      %p60 = por %p58, %p59
      %p61 = scmp.ne.s32.totalorder %s53, %s56
      %p62 = scmp.eq.s32.totalorder %s29, 0
      %p63 = por %p61, %p62
      %p64 = scmp.ne.s32.totalorder %s53, %s56
      %p65 = scmp.eq.s32.totalorder %s34, 1
      %p66 = por %p64, %p65
      %p67 = scmp.ne.s32.totalorder %s56, %s57
      %p68 = scmp.eq.s32.totalorder %s34, 0
      %p69 = por %p67, %p68
      %p70 = scmp.ne.s32.totalorder %s56, %s57
      %p71 = scmp.eq.s32.totalorder %s35, 1
      %p72 = por %p70, %p71
      %p74 = scmp.ne.s32.totalorder %s57, %s73
      %p75 = scmp.eq.s32.totalorder %s35, 0
      %p76 = por %p74, %p75
      %s78 = sadd.s32 %s77, 1
      %p81 = scmp.eq.s32.totalorder %s29, 1
      %p82 = scmp.ne.s32.totalorder %s77, %s79
      %p83 = scmp.eq.s32.totalorder %s29, 0
      %p84 = por %p82, %p83
      %p85 = scmp.ne.s32.totalorder %s77, %s79
      %p86 = scmp.eq.s32.totalorder %s34, 1
      %p87 = por %p85, %p86
      %p88 = scmp.ne.s32.totalorder %s79, %s80
      %p89 = scmp.eq.s32.totalorder %s34, 0
      %p90 = por %p88, %p89
      %p91 = scmp.ne.s32.totalorder %s79, %s80
      %p92 = scmp.eq.s32.totalorder %s35, 1
      %p93 = por %p91, %p92
      %p95 = scmp.ne.s32.totalorder %s80, %s94
      %p96 = scmp.eq.s32.totalorder %s35, 0
      %p97 = por %p95, %p96
      %s99 = sadd.s32 %s98, 1
      %p102 = scmp.eq.s32.totalorder %s29, 1
      %p103 = scmp.ne.s32.totalorder %s98, %s100
      %p104 = scmp.eq.s32.totalorder %s29, 0
      %p105 = por %p103, %p104
      %p106 = scmp.ne.s32.totalorder %s98, %s100
      %p107 = scmp.eq.s32.totalorder %s34, 1
      %p108 = por %p106, %p107
      %p109 = scmp.ne.s32.totalorder %s100, %s101
      %p110 = scmp.eq.s32.totalorder %s34, 0
      %p111 = por %p109, %p110
      %p112 = scmp.ne.s32.totalorder %s100, %s101
      %p113 = scmp.eq.s32.totalorder %s35, 1
      %p114 = por %p112, %p113
      %p116 = scmp.ne.s32.totalorder %s101, %s115
      %p117 = scmp.eq.s32.totalorder %s35, 0
      %p118 = por %p116, %p117
      %s120 = sadd.s32 %s119, 1
      %p123 = scmp.eq.s32.totalorder %s29, 1
      %p124 = scmp.ne.s32.totalorder %s119, %s121
      %p125 = scmp.eq.s32.totalorder %s29, 0
      %p126 = por %p124, %p125
      %p127 = scmp.ne.s32.totalorder %s119, %s121
      %p128 = scmp.eq.s32.totalorder %s34, 1
      %p129 = por %p127, %p128
      %p130 = scmp.ne.s32.totalorder %s121, %s122
      %p131 = scmp.eq.s32.totalorder %s34, 0
      %p132 = por %p130, %p131
      %p133 = scmp.ne.s32.totalorder %s121, %s122
      %p134 = scmp.eq.s32.totalorder %s35, 1
      %p135 = por %p133, %p134
      %p137 = scmp.ne.s32.totalorder %s122, %s136
      %p138 = scmp.eq.s32.totalorder %s35, 0
      %p139 = por %p137, %p138
      %s141 = sadd.s32 %s140, 1
      %p144 = scmp.eq.s32.totalorder %s29, 1
      %p145 = scmp.ne.s32.totalorder %s140, %s142
      %p146 = scmp.eq.s32.totalorder %s29, 0
      %p147 = por %p145, %p146
      %p148 = scmp.ne.s32.totalorder %s140, %s142
      %p149 = scmp.eq.s32.totalorder %s34, 1
      %p150 = por %p148, %p149
      %p151 = scmp.ne.s32.totalorder %s142, %s143
      %p152 = scmp.eq.s32.totalorder %s34, 0
      %p153 = por %p151, %p152
      %p154 = scmp.ne.s32.totalorder %s142, %s143
      %p155 = scmp.eq.s32.totalorder %s35, 1
      %p156 = por %p154, %p155
      %p158 = scmp.ne.s32.totalorder %s143, %s157
      %p159 = scmp.eq.s32.totalorder %s35, 0
      %p160 = por %p158, %p159
      %s162 = sadd.s32 %s161, 1
      %p165 = scmp.eq.s32.totalorder %s29, 1
      %p166 = scmp.ne.s32.totalorder %s161, %s163
      %p167 = scmp.eq.s32.totalorder %s29, 0
      %p168 = por %p166, %p167
      %p169 = scmp.ne.s32.totalorder %s161, %s163
      %p170 = scmp.eq.s32.totalorder %s34, 1
      %p171 = por %p169, %p170
      %p172 = scmp.ne.s32.totalorder %s163, %s164
      %p173 = scmp.eq.s32.totalorder %s34, 0
      %p174 = por %p172, %p173
      %p175 = scmp.ne.s32.totalorder %s163, %s164
      %p176 = scmp.eq.s32.totalorder %s35, 1
      %p177 = por %p175, %p176
      %p179 = scmp.ne.s32.totalorder %s164, %s178
      %p180 = scmp.eq.s32.totalorder %s35, 0
      %p181 = por %p179, %p180
      %s183 = sadd.s32 %s182, 1
      %p186 = scmp.eq.s32.totalorder %s29, 1
      %p187 = scmp.ne.s32.totalorder %s182, %s184
      %p188 = scmp.eq.s32.totalorder %s29, 0
      %p189 = por %p187, %p188
      %p190 = scmp.ne.s32.totalorder %s182, %s184
      %p191 = scmp.eq.s32.totalorder %s34, 1
      %p192 = por %p190, %p191
      %p193 = scmp.ne.s32.totalorder %s184, %s185
      %p194 = scmp.eq.s32.totalorder %s34, 0
      %p195 = por %p193, %p194
      %p196 = scmp.ne.s32.totalorder %s184, %s185
      %p197 = scmp.eq.s32.totalorder %s35, 1
      %p198 = por %p196, %p197
      %p200 = scmp.ne.s32.totalorder %s185, %s199
      %p201 = scmp.eq.s32.totalorder %s35, 0
      %p202 = por %p200, %p201
      %s204 = sadd.s32 %s203, 1
      %p207 = scmp.eq.s32.totalorder %s29, 1
      %p208 = scmp.ne.s32.totalorder %s203, %s205
      %p209 = scmp.eq.s32.totalorder %s29, 0
      %p210 = por %p208, %p209
      %p211 = scmp.ne.s32.totalorder %s203, %s205
      %p212 = scmp.eq.s32.totalorder %s34, 1
      %p213 = por %p211, %p212
      %p214 = scmp.ne.s32.totalorder %s205, %s206
      %p215 = scmp.eq.s32.totalorder %s34, 0
      %p216 = por %p214, %p215
      %p217 = scmp.ne.s32.totalorder %s205, %s206
      %p218 = scmp.eq.s32.totalorder %s35, 1
      %p219 = por %p217, %p218
      %p221 = scmp.ne.s32.totalorder %s206, %s220
      %p222 = scmp.eq.s32.totalorder %s35, 0
      %p223 = por %p221, %p222
      %s225 = sadd.s32 %s224, 1
      %p228 = scmp.eq.s32.totalorder %s29, 1
      %p229 = scmp.ne.s32.totalorder %s224, %s226
      %p230 = scmp.eq.s32.totalorder %s29, 0
      %p231 = por %p229, %p230
      %p232 = scmp.ne.s32.totalorder %s224, %s226
      %p233 = scmp.eq.s32.totalorder %s34, 1
      %p234 = por %p232, %p233
      %p235 = scmp.ne.s32.totalorder %s226, %s227
      %p236 = scmp.eq.s32.totalorder %s34, 0
      %p237 = por %p235, %p236
      %p238 = scmp.ne.s32.totalorder %s226, %s227
      %p239 = scmp.eq.s32.totalorder %s35, 1
      %p240 = por %p238, %p239
      %p242 = scmp.ne.s32.totalorder %s227, %s241
      %p243 = scmp.eq.s32.totalorder %s35, 0
      %p244 = por %p242, %p243
      %s245 = ssub.s32 %s36, %s48
      %s246 = ssub.s32 %s37, %s44
      %s247 = sor.u32 %s245, %s246
      %p248 = scmp.eq.s32.totalorder %s247, 0
      %s250 = sadd.s32 %s249, 1
      %s251 = scalar_select %p248, %s249, %s250
      %p254 = pneg %p248
      %p255 = scmp.eq.s32.totalorder %s29, 1
      %p256 = por %p254, %p255
      %p257 = scmp.ne.s32.totalorder %s249, %s252
      %p258 = scmp.eq.s32.totalorder %s29, 0
      %p259 = por %p257, %p258
      %p260 = scmp.ne.s32.totalorder %s249, %s252
      %p261 = scmp.eq.s32.totalorder %s34, 1
      %p262 = por %p260, %p261
      %p263 = scmp.ne.s32.totalorder %s252, %s253
      %p264 = scmp.eq.s32.totalorder %s34, 0
      %p265 = por %p263, %p264
      %p266 = scmp.ne.s32.totalorder %s252, %s253
      %p267 = scmp.eq.s32.totalorder %s35, 1
      %p268 = por %p266, %p267
      %p270 = scmp.ne.s32.totalorder %s253, %s269
      %p271 = scmp.eq.s32.totalorder %s35, 0
      %p272 = por %p270, %p271
      %s273 = ssub.s32 %s36, %s48
      %s274 = ssub.s32 %s37, %s44
      %s275 = sor.u32 %s273, %s274
      %p276 = scmp.eq.s32.totalorder %s275, 0
      %s278 = sadd.s32 %s277, 1
      %s279 = scalar_select %p276, %s277, %s278
      %p282 = pneg %p276
      %p283 = scmp.eq.s32.totalorder %s29, 1
      %p284 = por %p282, %p283
      %p285 = scmp.ne.s32.totalorder %s277, %s280
      %p286 = scmp.eq.s32.totalorder %s29, 0
      %p287 = por %p285, %p286
      %p288 = scmp.ne.s32.totalorder %s277, %s280
      %p289 = scmp.eq.s32.totalorder %s34, 1
      %p290 = por %p288, %p289
      %p291 = scmp.ne.s32.totalorder %s280, %s281
      %p292 = scmp.eq.s32.totalorder %s34, 0
      %p293 = por %p291, %p292
      %p294 = scmp.ne.s32.totalorder %s280, %s281
      %p295 = scmp.eq.s32.totalorder %s35, 1
      %p296 = por %p294, %p295
      %p298 = scmp.ne.s32.totalorder %s281, %s297
      %p299 = scmp.eq.s32.totalorder %s35, 0
      %p300 = por %p298, %p299
      %s301 = ssub.s32 %s36, %s48
      %s302 = ssub.s32 %s37, %s44
      %s303 = sor.u32 %s301, %s302
      %p304 = scmp.eq.s32.totalorder %s303, 0
      %s306 = sadd.s32 %s305, 1
      %s307 = scalar_select %p304, %s305, %s306
      %p310 = pneg %p304
      %p311 = scmp.eq.s32.totalorder %s29, 1
      %p312 = por %p310, %p311
      %p313 = scmp.ne.s32.totalorder %s305, %s308
      %p314 = scmp.eq.s32.totalorder %s29, 0
      %p315 = por %p313, %p314
      %p316 = scmp.ne.s32.totalorder %s305, %s308
      %p317 = scmp.eq.s32.totalorder %s34, 1
      %p318 = por %p316, %p317
      %p319 = scmp.ne.s32.totalorder %s308, %s309
      %p320 = scmp.eq.s32.totalorder %s34, 0
      %p321 = por %p319, %p320
      %p322 = scmp.ne.s32.totalorder %s308, %s309
      %p323 = scmp.eq.s32.totalorder %s35, 1
      %p324 = por %p322, %p323
      %p326 = scmp.ne.s32.totalorder %s309, %s325
      %p327 = scmp.eq.s32.totalorder %s35, 0
      %p328 = por %p326, %p327
      %p329 = scmp.le.s32.totalorder 1, %s29
      %p330 = scmp.lt.s32.totalorder %s29, 3
      %p331 = pnand %p329, %p330
      %p332 = pneg %p331
      // Predicated region
      $region9: #{tpu_custom_call.1} parent=5 // pred_check
        _
      $region10: #{tpu_custom_call.1} parent=5 // pred_check_branch
        %334 = sbr.rel (%p331) target = $region12
      $region11: #{tpu_custom_call.1} parent=5 // pred_region
        %s335 = ssub.s32 %s29, 1
        // Predicated region
        $region13: #{tpu_custom_call.1} parent=11 // pred_check
          %p336 = pneg %p90
        $region14: #{tpu_custom_call.1} parent=11 // pred_check_branch
          %338 = sbr.rel (%p336) target = $region16
        $region15: #{tpu_custom_call.1} parent=11 // pred_region
          _
        $region16: #{tpu_custom_call.1} parent=11 // pred_fallthru
          _
        // Predicated region
        $region17: #{tpu_custom_call.1} parent=11 // pred_check
          %p339 = pneg %p111
        $region18: #{tpu_custom_call.1} parent=11 // pred_check_branch
          %341 = sbr.rel (%p339) target = $region20
        $region19: #{tpu_custom_call.1} parent=11 // pred_region
          _
        $region20: #{tpu_custom_call.1} parent=11 // pred_fallthru
          _
        // Predicated region
        $region21: #{tpu_custom_call.1} parent=11 // pred_check
          %p342 = pneg %p132
        $region22: #{tpu_custom_call.1} parent=11 // pred_check_branch
          %344 = sbr.rel (%p342) target = $region24
        $region23: #{tpu_custom_call.1} parent=11 // pred_region
          %s346 = ssub.s32 512, 512
          %347 = vsyncadd [#allocation6], %s346
          %s348 = sshll.u32 [#allocation5], 4
          %s349 = int_to_ptr.vmem [resolvable:$true] %s348
          %354 = dma.hbm_to_vmem [thread:$0]  %s3, 512, %s349, [#allocation6], 128, 128, 8
        $region24: #{tpu_custom_call.1} parent=11 // pred_fallthru
          _
        // Predicated region
        $region25: #{tpu_custom_call.1} parent=11 // pred_check
          %p355 = pneg %p153
        $region26: #{tpu_custom_call.1} parent=11 // pred_check_branch
          %357 = sbr.rel (%p355) target = $region28
        $region27: #{tpu_custom_call.1} parent=11 // pred_region
          _
        $region28: #{tpu_custom_call.1} parent=11 // pred_fallthru
          _
        // Predicated region
        $region29: #{tpu_custom_call.1} parent=11 // pred_check
          %p358 = pneg %p174
        $region30: #{tpu_custom_call.1} parent=11 // pred_check_branch
          %360 = sbr.rel (%p358) target = $region32
        $region31: #{tpu_custom_call.1} parent=11 // pred_region
          %s362 = ssub.s32 512, 512
          %363 = vsyncadd [#allocation6], %s362
          %s364 = sshll.u32 [#allocation7], 4
          %s365 = int_to_ptr.vmem [resolvable:$true] %s364
          %370 = dma.hbm_to_vmem [thread:$0]  %s5, 512, %s365, [#allocation6], 128, 128, 8
        $region32: #{tpu_custom_call.1} parent=11 // pred_fallthru
          _
        // Predicated region
        $region33: #{tpu_custom_call.1} parent=11 // pred_check
          %p371 = pneg %p195
        $region34: #{tpu_custom_call.1} parent=11 // pred_check_branch
          %373 = sbr.rel (%p371) target = $region36
        $region35: #{tpu_custom_call.1} parent=11 // pred_region
          _
        $region36: #{tpu_custom_call.1} parent=11 // pred_fallthru
          _
        // Predicated region
        $region37: #{tpu_custom_call.1} parent=11 // pred_check
          %p374 = pneg %p216
        $region38: #{tpu_custom_call.1} parent=11 // pred_check_branch
          %376 = sbr.rel (%p374) target = $region40
        $region39: #{tpu_custom_call.1} parent=11 // pred_region
          %s378 = ssub.s32 512, 512
          %379 = vsyncadd [#allocation9], %s378
          %s380 = sshll.u32 [#allocation8], 4
          %s381 = int_to_ptr.vmem [resolvable:$true] %s380
          %386 = dma.hbm_to_vmem [thread:$0]  %s7, 512, %s381, [#allocation9], 128, 128, 8
        $region40: #{tpu_custom_call.1} parent=11 // pred_fallthru
          _
        // Predicated region
        $region41: #{tpu_custom_call.1} parent=11 // pred_check
          %p387 = pneg %p237
        $region42: #{tpu_custom_call.1} parent=11 // pred_check_branch
          %389 = sbr.rel (%p387) target = $region44
        $region43: #{tpu_custom_call.1} parent=11 // pred_region
          _
        $region44: #{tpu_custom_call.1} parent=11 // pred_fallthru
          _
      $region12: #{tpu_custom_call.1} parent=5 // pred_fallthru
        _
      %p390 = scmp.lt.s32.totalorder %s29, 2
      // Predicated region
      $region45: #{tpu_custom_call.1} parent=5 // pred_check
        %p391 = pneg %p390
      $region46: #{tpu_custom_call.1} parent=5 // pred_check_branch
        %393 = sbr.rel (%p391) target = $region48
      $region47: #{tpu_custom_call.1} parent=5 // pred_region
        // Predicated region
        $region49: #{tpu_custom_call.1} parent=47 // pred_check
          %p394 = pneg %p63
        $region50: #{tpu_custom_call.1} parent=47 // pred_check_branch
          %396 = sbr.rel (%p394) target = $region52
        $region51: #{tpu_custom_call.1} parent=47 // pred_region
          %s397 = sand.u32 %s53, 1
          %s398 = scalar_lea.sflag [#allocation3], %s397
          %s399 = sand.u32 %s53, 1
          %s400 = smul.addr %s399, 8
          %s401 = scalar_lea.vmem [#allocation2], %s400
          %s403 = ssub.s32 128, 128
          %404 = vsyncadd %s398, %s403
          %s405 = sadd.s32 %s37, %s36
          %s406 = smul.addr %s405, 128
          %s407 = scalar_lea.hbm %s0, %s406
          %s409 = sshll.u32 %s401, 4
          %s410 = int_to_ptr.vmem [resolvable:$true] %s409
          %412 = dma.hbm_to_vmem [thread:$0]  %s407, 128, %s410, %s398
        $region52: #{tpu_custom_call.1} parent=47 // pred_fallthru
          _
      $region48: #{tpu_custom_call.1} parent=5 // pred_fallthru
        _
      %p413 = scmp.le.s32.totalorder 1, %s29
      %p414 = scmp.lt.s32.totalorder %s29, 3
      %p415 = pnand %p413, %p414
      %p416 = pneg %p415
      // Predicated region
      $region53: #{tpu_custom_call.1} parent=5 // pred_check
        _
      $region54: #{tpu_custom_call.1} parent=5 // pred_check_branch
        %418 = sbr.rel (%p415) target = $region56
      $region55: #{tpu_custom_call.1} parent=5 // pred_region
        %s419 = ssub.s32 %s29, 1
        %s420 = sand.u32 %s56, 1
        %s421 = scalar_lea.sflag [#allocation3], %s420
        %s422 = sand.u32 %s56, 1
        %s423 = smul.addr %s422, 8
        %s424 = scalar_lea.vmem [#allocation2], %s423
        // Predicated region
        $region57: #{tpu_custom_call.1} parent=55 // pred_check
          %p425 = pneg %p69
        $region58: #{tpu_custom_call.1} parent=55 // pred_check_branch
          %427 = sbr.rel (%p425) target = $region60
        $region59: #{tpu_custom_call.1} parent=55 // pred_region
          %428 = dma.done %s421, 128
        $region60: #{tpu_custom_call.1} parent=55 // pred_fallthru
          _
        // Predicated region
        $region61: #{tpu_custom_call.1} parent=55 // pred_check
          %p429 = pneg %p132
        $region62: #{tpu_custom_call.1} parent=55 // pred_check_branch
          %431 = sbr.rel (%p429) target = $region64
        $region63: #{tpu_custom_call.1} parent=55 // pred_region
          %432 = dma.done [#allocation6], 512
        $region64: #{tpu_custom_call.1} parent=55 // pred_fallthru
          _
        // Predicated region
        $region65: #{tpu_custom_call.1} parent=55 // pred_check
          %p433 = pneg %p174
        $region66: #{tpu_custom_call.1} parent=55 // pred_check_branch
          %435 = sbr.rel (%p433) target = $region68
        $region67: #{tpu_custom_call.1} parent=55 // pred_region
          %436 = dma.done [#allocation6], 512
        $region68: #{tpu_custom_call.1} parent=55 // pred_fallthru
          _
        // Predicated region
        $region69: #{tpu_custom_call.1} parent=55 // pred_check
          %p437 = pneg %p216
        $region70: #{tpu_custom_call.1} parent=55 // pred_check_branch
          %439 = sbr.rel (%p437) target = $region72
        $region71: #{tpu_custom_call.1} parent=55 // pred_region
          %440 = dma.done [#allocation9], 512
        $region72: #{tpu_custom_call.1} parent=55 // pred_fallthru
          _
        %s441 = sand.u32 %s56, 1
        %s442 = scalar_lea.sflag [#allocation3], %s441
        %s443 = sand.u32 %s56, 1
        %s444 = smul.addr %s443, 8
        %s445 = scalar_lea.vmem [#allocation2], %s444
        %p446 = pneg %p69
        %p447 = pneg %p66
        %p448 = pneg %p90
        %p449 = pneg %p87
        %p450 = pneg %p111
        %p451 = pneg %p108
        %p452 = pneg %p132
        %p453 = pneg %p129
        %p454 = pneg %p153
        %p455 = pneg %p150
        %p456 = pneg %p174
        %p457 = pneg %p171
        %p458 = pneg %p195
        %p459 = pneg %p192
        %p460 = pneg %p216
        %p461 = pneg %p213
        %p462 = pneg %p237
        %p463 = pneg %p234
        %p464 = pneg %p265
        %p465 = pneg %p262
        %s466 = sand.u32 %s252, 1
        %s467 = scalar_lea.sflag [#allocation4], %s466
        %s468 = sand.u32 %s252, 1
        %s469 = smul.addr %s468, 8
        %s470 = scalar_lea.vmem [#allocation10], %s469
        %p471 = pneg %p293
        %p472 = pneg %p290
        %s473 = sand.u32 %s34, 1
        %s474 = scalar_lea.sflag [#allocation12], %s473
        %s475 = sand.u32 %s280, 1
        %s476 = smul.addr %s475, 8
        %s477 = scalar_lea.vmem [#allocation11], %s476
        %p478 = pneg %p321
        %p479 = pneg %p318
        %s480 = sand.u32 %s34, 1
        %s481 = scalar_lea.sflag [#allocation12], %s480
        %s482 = sand.u32 %s308, 1
        %s483 = smul.addr %s482, 8
        %s484 = scalar_lea.vmem [#allocation13], %s483
        %v485 = vld [vmem:[%s424] sm:$0xff]
        %v486 = vld [vmem:[%s1] sm:$0x1]
        %v487 = vld [vmem:[%s2] sm:$0x1]
        %vm488 = vcmask 261120
        %v489 = vsel %vm488, %v485, 0.0
        %490 = vadd.xlane.f32.xlu0 %v489
        %v491 = vpop.xlane.xlu0 %490
        %v492 = vmul.f32 %v491, 0.03125
        %v493 = vsub.f32 %v485, %v492
        %v494 = vmul.f32 %v493, %v493
        %v495 = vsel %vm488, %v494, 0.0
        %496 = vadd.xlane.f32.xlu0 %v495
        %v497 = vpop.xlane.xlu0 %496
        %v498 = vmul.f32 %v497, 0.032258064
        %v499 = vrsqrt.pop %v498
        %v500 = vmul.f32 %v498, %v499
        %vm501 = vcmp.eq.f32.partialorder %v498, inf
        %v502 = vsel %vm501, %v498, %v500
        %vm503 = vcmp.eq.f32.partialorder %v498, 0.0
        %v504 = vand.u32 %v498, 2147483648
        %v505 = vsel %vm503, %v504, %v502
        %v506 = vadd.f32 %v505, 1e-06
        %v507 = vrcp.pop %v506
        %v509 = vlaneseq
        %v510 = vshrl.u32 %v509, 7
        %v511 = vsub.s32 0, %v510
        %v512 = vrot.slane %v486, %v511
        %v514 = vmul.f32 %v512, %v507
        %v515 = vmul.f32 %v493, %v514
        %v517 = vlaneseq
        %v518 = vshrl.u32 %v517, 7
        %v519 = vsub.s32 0, %v518
        %v520 = vrot.slane %v487, %v519
        %v522 = vadd.f32 %v515, %v520
        %v523 = vld [vmem:[#allocation5] sm:$0xff]
        %v524 = vld [vmem:[#allocation5 + $0x8] sm:$0xff]
        %v525 = vld [vmem:[#allocation5 + $0x10] sm:$0xff]
        %v526 = vld [vmem:[#allocation5 + $0x18] sm:$0xff]
        %v527 = vld [vmem:[%s4] sm:$0x1]
        %v529 = vlaneseq
        %v530 = vshrl.u32 %v529, 7
        %v531 = vsub.s32 0, %v530
        %v532 = vrot.slane %v527, %v531
        %v535 = vsel %vm488, %v522, 0
        %537 = vmatprep.subr.mxu0 0.0
        %538 = vmatpush1.msra.mxu0 %v523
        %539 = vmatprep.subr.mxu0 0.0
        %540 = vmatpush1.msra.mxu0 %v524
        %541 = vmatprep.subr.mxu0 0.0
        %542 = vmatpush1.msra.mxu0 %v525
        %543 = vmatprep.subr.mxu0 0.0
        %544 = vmatpush1.msra.mxu0 %v526
        %545 = vmatprep.subr.mxu0 0.0
        %546 = vmatpush1.msra.mxu0 0.0
        %547 = vmatprep.subr.mxu0 0.0
        %548 = vmatpush1.msra.mxu0 0.0
        %549 = vmatprep.subr.mxu0 0.0
        %550 = vmatpush1.msra.mxu0 0.0
        %551 = vmatprep.subr.mxu0 0.0
        %552 = vmatpush1.msra.mxu0 0.0
        %553 = vmatprep.subr.mxu0 0.0
        %554 = vmatpush1.msra.mxu0 0.0
        %555 = vmatprep.subr.mxu0 0.0
        %556 = vmatpush1.msra.mxu0 0.0
        %557 = vmatprep.subr.mxu0 0.0
        %558 = vmatpush1.msra.mxu0 0.0
        %559 = vmatprep.subr.mxu0 0.0
        %560 = vmatpush1.msra.mxu0 0.0
        %561 = vmatprep.subr.mxu0 0.0
        %562 = vmatpush1.msra.mxu0 0.0
        %563 = vmatprep.subr.mxu0 0.0
        %564 = vmatpush1.msra.mxu0 0.0
        %565 = vmatprep.subr.mxu0 0.0
        %566 = vmatpush1.msra.mxu0 0.0
        %567 = vmatprep.subr.mxu0 0.0
        %568 = vmatpush1.msra.mxu0 0.0
        %569 = vmatprep.subr.mxu0 0.0
        %570 = vmatpush1.msra.mxu0 0.0
        %571 = vmatprep.subr.mxu0 0.0
        %572 = vmatpush1.msra.mxu0 0.0
        %573 = vmatprep.subr.mxu0 0.0
        %574 = vmatpush1.msra.mxu0 0.0
        %575 = vmatprep.subr.mxu0 0.0
        %576 = vmatpush1.msra.mxu0 0.0
        %577 = vmatprep.subr.mxu0 0.0
        %578 = vmatpush1.msra.mxu0 0.0
        %579 = vmatprep.subr.mxu0 0.0
        %580 = vmatpush1.msra.mxu0 0.0
        %581 = vmatprep.subr.mxu0 0.0
        %582 = vmatpush1.msra.mxu0 0.0
        %583 = vmatprep.subr.mxu0 0.0
        %584 = vmatpush1.msra.mxu0 0.0
        %585 = vmatprep.subr.mxu0 0.0
        %586 = vmatpush1.msra.mxu0 0.0
        %587 = vmatprep.subr.mxu0 0.0
        %588 = vmatpush1.msra.mxu0 0.0
        %589 = vmatprep.subr.mxu0 0.0
        %590 = vmatpush1.msra.mxu0 0.0
        %591 = vmatprep.subr.mxu0 0.0
        %592 = vmatpush1.msra.mxu0 0.0
        %593 = vmatprep.subr.mxu0 0.0
        %594 = vmatpush1.msra.mxu0 0.0
        %595 = vmatprep.subr.mxu0 0.0
        %596 = vmatpush1.msra.mxu0 0.0
        %597 = vmatprep.subr.mxu0 0.0
        %598 = vmatpush1.msra.mxu0 0.0
        %599 = vmatprep.subr.mxu0 0.0
        %600 = vmatpush1.msra.mxu0 0.0
        %601 = vmatprep.mubr.f32.mxu0 0.0
        %602 = vmatmul.mubr.f32.gmra.mrb[0].mxu0 %v535
        %v603 = vpop.f32.mrb[0].mxu0
        %v604 = vadd.f32 %v532, %v603
        %v605 = vpop.f32.mrb[0].mxu0
        %606 = vdwg.mxu0
        %607 = vst.msk [vmem:[%s470] sm:$0xff] %vm488, %v604
        %v608 = vld [vmem:[#allocation7] sm:$0xff]
        %v609 = vld [vmem:[#allocation7 + $0x8] sm:$0xff]
        %v610 = vld [vmem:[#allocation7 + $0x10] sm:$0xff]
        %v611 = vld [vmem:[#allocation7 + $0x18] sm:$0xff]
        %v612 = vld [vmem:[%s6] sm:$0x1]
        %v614 = vlaneseq
        %v615 = vshrl.u32 %v614, 7
        %v616 = vsub.s32 0, %v615
        %v617 = vrot.slane %v612, %v616
        %619 = vmatprep.subr.mxu0 0.0
        %620 = vmatpush1.msra.mxu0 %v608
        %621 = vmatprep.subr.mxu0 0.0
        %622 = vmatpush1.msra.mxu0 %v609
        %623 = vmatprep.subr.mxu0 0.0
        %624 = vmatpush1.msra.mxu0 %v610
        %625 = vmatprep.subr.mxu0 0.0
        %626 = vmatpush1.msra.mxu0 %v611
        %627 = vmatprep.subr.mxu0 0.0
        %628 = vmatpush1.msra.mxu0 0.0
        %629 = vmatprep.subr.mxu0 0.0
        %630 = vmatpush1.msra.mxu0 0.0
        %631 = vmatprep.subr.mxu0 0.0
        %632 = vmatpush1.msra.mxu0 0.0
        %633 = vmatprep.subr.mxu0 0.0
        %634 = vmatpush1.msra.mxu0 0.0
        %635 = vmatprep.subr.mxu0 0.0
        %636 = vmatpush1.msra.mxu0 0.0
        %637 = vmatprep.subr.mxu0 0.0
        %638 = vmatpush1.msra.mxu0 0.0
        %639 = vmatprep.subr.mxu0 0.0
        %640 = vmatpush1.msra.mxu0 0.0
        %641 = vmatprep.subr.mxu0 0.0
        %642 = vmatpush1.msra.mxu0 0.0
        %643 = vmatprep.subr.mxu0 0.0
        %644 = vmatpush1.msra.mxu0 0.0
        %645 = vmatprep.subr.mxu0 0.0
        %646 = vmatpush1.msra.mxu0 0.0
        %647 = vmatprep.subr.mxu0 0.0
        %648 = vmatpush1.msra.mxu0 0.0
        %649 = vmatprep.subr.mxu0 0.0
        %650 = vmatpush1.msra.mxu0 0.0
        %651 = vmatprep.subr.mxu0 0.0
        %652 = vmatpush1.msra.mxu0 0.0
        %653 = vmatprep.subr.mxu0 0.0
        %654 = vmatpush1.msra.mxu0 0.0
        %655 = vmatprep.subr.mxu0 0.0
        %656 = vmatpush1.msra.mxu0 0.0
        %657 = vmatprep.subr.mxu0 0.0
        %658 = vmatpush1.msra.mxu0 0.0
        %659 = vmatprep.subr.mxu0 0.0
        %660 = vmatpush1.msra.mxu0 0.0
        %661 = vmatprep.subr.mxu0 0.0
        %662 = vmatpush1.msra.mxu0 0.0
        %663 = vmatprep.subr.mxu0 0.0
        %664 = vmatpush1.msra.mxu0 0.0
        %665 = vmatprep.subr.mxu0 0.0
        %666 = vmatpush1.msra.mxu0 0.0
        %667 = vmatprep.subr.mxu0 0.0
        %668 = vmatpush1.msra.mxu0 0.0
        %669 = vmatprep.subr.mxu0 0.0
        %670 = vmatpush1.msra.mxu0 0.0
        %671 = vmatprep.subr.mxu0 0.0
        %672 = vmatpush1.msra.mxu0 0.0
        %673 = vmatprep.subr.mxu0 0.0
        %674 = vmatpush1.msra.mxu0 0.0
        %675 = vmatprep.subr.mxu0 0.0
        %676 = vmatpush1.msra.mxu0 0.0
        %677 = vmatprep.subr.mxu0 0.0
        %678 = vmatpush1.msra.mxu0 0.0
        %679 = vmatprep.subr.mxu0 0.0
        %680 = vmatpush1.msra.mxu0 0.0
        %681 = vmatprep.subr.mxu0 0.0
        %682 = vmatpush1.msra.mxu0 0.0
        %683 = vmatprep.mubr.f32.mxu0 0.0
        %684 = vmatmul.mubr.f32.gmra.mrb[0].mxu0 %v535
        %v685 = vpop.f32.mrb[0].mxu0
        %v686 = vadd.f32 %v617, %v685
        %v687 = vpop.f32.mrb[0].mxu0
        %688 = vdwg.mxu0
        %689 = vst.msk [vmem:[%s477] sm:$0xff] %vm488, %v686
        %v690 = vld [vmem:[#allocation8] sm:$0xff]
        %v691 = vld [vmem:[#allocation8 + $0x8] sm:$0xff]
        %v692 = vld [vmem:[#allocation8 + $0x10] sm:$0xff]
        %v693 = vld [vmem:[#allocation8 + $0x18] sm:$0xff]
        %v694 = vld [vmem:[%s8] sm:$0x1]
        %v696 = vlaneseq
        %v697 = vshrl.u32 %v696, 7
        %v698 = vsub.s32 0, %v697
        %v699 = vrot.slane %v694, %v698
        %701 = vmatprep.subr.mxu0 0.0
        %702 = vmatpush1.msra.mxu0 %v690
        %703 = vmatprep.subr.mxu0 0.0
        %704 = vmatpush1.msra.mxu0 %v691
        %705 = vmatprep.subr.mxu0 0.0
        %706 = vmatpush1.msra.mxu0 %v692
        %707 = vmatprep.subr.mxu0 0.0
        %708 = vmatpush1.msra.mxu0 %v693
        %709 = vmatprep.subr.mxu0 0.0
        %710 = vmatpush1.msra.mxu0 0.0
        %711 = vmatprep.subr.mxu0 0.0
        %712 = vmatpush1.msra.mxu0 0.0
        %713 = vmatprep.subr.mxu0 0.0
        %714 = vmatpush1.msra.mxu0 0.0
        %715 = vmatprep.subr.mxu0 0.0
        %716 = vmatpush1.msra.mxu0 0.0
        %717 = vmatprep.subr.mxu0 0.0
        %718 = vmatpush1.msra.mxu0 0.0
        %719 = vmatprep.subr.mxu0 0.0
        %720 = vmatpush1.msra.mxu0 0.0
        %721 = vmatprep.subr.mxu0 0.0
        %722 = vmatpush1.msra.mxu0 0.0
        %723 = vmatprep.subr.mxu0 0.0
        %724 = vmatpush1.msra.mxu0 0.0
        %725 = vmatprep.subr.mxu0 0.0
        %726 = vmatpush1.msra.mxu0 0.0
        %727 = vmatprep.subr.mxu0 0.0
        %728 = vmatpush1.msra.mxu0 0.0
        %729 = vmatprep.subr.mxu0 0.0
        %730 = vmatpush1.msra.mxu0 0.0
        %731 = vmatprep.subr.mxu0 0.0
        %732 = vmatpush1.msra.mxu0 0.0
        %733 = vmatprep.subr.mxu0 0.0
        %734 = vmatpush1.msra.mxu0 0.0
        %735 = vmatprep.subr.mxu0 0.0
        %736 = vmatpush1.msra.mxu0 0.0
        %737 = vmatprep.subr.mxu0 0.0
        %738 = vmatpush1.msra.mxu0 0.0
        %739 = vmatprep.subr.mxu0 0.0
        %740 = vmatpush1.msra.mxu0 0.0
        %741 = vmatprep.subr.mxu0 0.0
        %742 = vmatpush1.msra.mxu0 0.0
        %743 = vmatprep.subr.mxu0 0.0
        %744 = vmatpush1.msra.mxu0 0.0
        %745 = vmatprep.subr.mxu0 0.0
        %746 = vmatpush1.msra.mxu0 0.0
        %747 = vmatprep.subr.mxu0 0.0
        %748 = vmatpush1.msra.mxu0 0.0
        %749 = vmatprep.subr.mxu0 0.0
        %750 = vmatpush1.msra.mxu0 0.0
        %751 = vmatprep.subr.mxu0 0.0
        %752 = vmatpush1.msra.mxu0 0.0
        %753 = vmatprep.subr.mxu0 0.0
        %754 = vmatpush1.msra.mxu0 0.0
        %755 = vmatprep.subr.mxu0 0.0
        %756 = vmatpush1.msra.mxu0 0.0
        %757 = vmatprep.subr.mxu0 0.0
        %758 = vmatpush1.msra.mxu0 0.0
        %759 = vmatprep.subr.mxu0 0.0
        %760 = vmatpush1.msra.mxu0 0.0
        %761 = vmatprep.subr.mxu0 0.0
        %762 = vmatpush1.msra.mxu0 0.0
        %763 = vmatprep.subr.mxu0 0.0
        %764 = vmatpush1.msra.mxu0 0.0
        %765 = vmatprep.mubr.f32.mxu0 0.0
        %766 = vmatmul.mubr.f32.gmra.mrb[0].mxu0 %v535
        %v767 = vpop.f32.mrb[0].mxu0
        %v768 = vadd.f32 %v699, %v767
        %v769 = vpop.f32.mrb[0].mxu0
        %770 = vdwg.mxu0
        %771 = vst.msk [vmem:[%s484] sm:$0xff] %vm488, %v768
        %s772 = sand.u32 %s252, 1
        %s773 = scalar_lea.sflag [#allocation4], %s772
        %s774 = sand.u32 %s252, 1
        %s775 = smul.addr %s774, 8
        %s776 = scalar_lea.vmem [#allocation10], %s775
        %s777 = sand.u32 %s34, 1
        %s778 = scalar_lea.sflag [#allocation12], %s777
        %s779 = sand.u32 %s280, 1
        %s780 = smul.addr %s779, 8
        %s781 = scalar_lea.vmem [#allocation11], %s780
        %s782 = sand.u32 %s34, 1
        %s783 = scalar_lea.sflag [#allocation12], %s782
        %s784 = sand.u32 %s308, 1
        %s785 = smul.addr %s784, 8
        %s786 = scalar_lea.vmem [#allocation13], %s785
        // Predicated region
        $region73: #{tpu_custom_call.1} parent=55 // pred_check
          %p787 = pneg %p262
        $region74: #{tpu_custom_call.1} parent=55 // pred_check_branch
          %789 = sbr.rel (%p787) target = $region76
        $region75: #{tpu_custom_call.1} parent=55 // pred_region
          %s791 = ssub.s32 128, 128
          %792 = vsyncadd %s773, %s791
          %s793 = sadd.s32 %s39, %s38
          %s794 = smul.addr %s793, 128
          %s795 = scalar_lea.hbm %s9, %s794
          %s797 = sshll.u32 %s776, 4
          %s798 = int_to_ptr.vmem [resolvable:$true] %s797
          %800 = dma.vmem_to_hbm [thread:$0]  %s798, 128, %s795, %s773
        $region76: #{tpu_custom_call.1} parent=55 // pred_fallthru
          _
        // Predicated region
        $region77: #{tpu_custom_call.1} parent=55 // pred_check
          %p801 = pneg %p290
        $region78: #{tpu_custom_call.1} parent=55 // pred_check_branch
          %803 = sbr.rel (%p801) target = $region80
        $region79: #{tpu_custom_call.1} parent=55 // pred_region
          %s805 = ssub.s32 128, 128
          %806 = vsyncadd %s778, %s805
          %s807 = sadd.s32 %s39, %s38
          %s808 = smul.addr %s807, 128
          %s809 = scalar_lea.hbm %s10, %s808
          %s811 = sshll.u32 %s781, 4
          %s812 = int_to_ptr.vmem [resolvable:$true] %s811
          %814 = dma.vmem_to_hbm [thread:$0]  %s812, 128, %s809, %s778
        $region80: #{tpu_custom_call.1} parent=55 // pred_fallthru
          _
        // Predicated region
        $region81: #{tpu_custom_call.1} parent=55 // pred_check
          %p815 = pneg %p318
        $region82: #{tpu_custom_call.1} parent=55 // pred_check_branch
          %817 = sbr.rel (%p815) target = $region84
        $region83: #{tpu_custom_call.1} parent=55 // pred_region
          %s819 = ssub.s32 128, 128
          %820 = vsyncadd %s783, %s819
          %s821 = sadd.s32 %s39, %s38
          %s822 = smul.addr %s821, 128
          %s823 = scalar_lea.hbm %s11, %s822
          %s825 = sshll.u32 %s786, 4
          %s826 = int_to_ptr.vmem [resolvable:$true] %s825
          %828 = dma.vmem_to_hbm [thread:$0]  %s826, 128, %s823, %s783
        $region84: #{tpu_custom_call.1} parent=55 // pred_fallthru
          _
      $region56: #{tpu_custom_call.1} parent=5 // pred_fallthru
        _
      %p829 = scmp.le.s32.totalorder 2, %s29
      // Predicated region
      $region85: #{tpu_custom_call.1} parent=5 // pred_check
        %p830 = pneg %p829
      $region86: #{tpu_custom_call.1} parent=5 // pred_check_branch
        %832 = sbr.rel (%p830) target = $region88
      $region87: #{tpu_custom_call.1} parent=5 // pred_region
        %s833 = ssub.s32 %s29, 2
        // Predicated region
        $region89: #{tpu_custom_call.1} parent=87 // pred_check
          %p834 = pneg %p268
        $region90: #{tpu_custom_call.1} parent=87 // pred_check_branch
          %836 = sbr.rel (%p834) target = $region92
        $region91: #{tpu_custom_call.1} parent=87 // pred_region
          %s837 = sand.u32 %s253, 1
          %s838 = scalar_lea.sflag [#allocation4], %s837
          %s839 = sand.u32 %s253, 1
          %s840 = smul.addr %s839, 8
          %s841 = scalar_lea.vmem [#allocation10], %s840
          %842 = dma.done %s838, 128
        $region92: #{tpu_custom_call.1} parent=87 // pred_fallthru
          _
        // Predicated region
        $region93: #{tpu_custom_call.1} parent=87 // pred_check
          %p843 = pneg %p296
        $region94: #{tpu_custom_call.1} parent=87 // pred_check_branch
          %845 = sbr.rel (%p843) target = $region96
        $region95: #{tpu_custom_call.1} parent=87 // pred_region
          %s846 = sand.u32 %s35, 1
          %s847 = scalar_lea.sflag [#allocation12], %s846
          %s848 = sand.u32 %s281, 1
          %s849 = smul.addr %s848, 8
          %s850 = scalar_lea.vmem [#allocation11], %s849
          %851 = dma.done %s847, 128
        $region96: #{tpu_custom_call.1} parent=87 // pred_fallthru
          _
        // Predicated region
        $region97: #{tpu_custom_call.1} parent=87 // pred_check
          %p852 = pneg %p324
        $region98: #{tpu_custom_call.1} parent=87 // pred_check_branch
          %854 = sbr.rel (%p852) target = $region100
        $region99: #{tpu_custom_call.1} parent=87 // pred_region
          %s855 = sand.u32 %s35, 1
          %s856 = scalar_lea.sflag [#allocation12], %s855
          %s857 = sand.u32 %s309, 1
          %s858 = smul.addr %s857, 8
          %s859 = scalar_lea.vmem [#allocation13], %s858
          %860 = dma.done %s856, 128
        $region100: #{tpu_custom_call.1} parent=87 // pred_fallthru
          _
      $region88: #{tpu_custom_call.1} parent=5 // pred_fallthru
        _
    $region6: #{tpu_custom_call.1} parent=1 // loop_footer
      %s33 = sadd.s32 1, %s29
    $region7: #{tpu_custom_call.1} parent=1 // loop_footer_branch
      %28 = sbr.rel target = $region3
    $region8: #{tpu_custom_call.1} parent=1 // loop_exit
      _
    %861 = vsyncpa [#allocation3], 1
    %s862 = scalar_lea.sflag [#allocation3], 1
    %863 = vsyncpa %s862, 1
    %864 = vsyncpa [#allocation6], 1
    %865 = vsyncpa [#allocation9], 1
    %866 = vsyncpa [#allocation4], 1
    %s867 = scalar_lea.sflag [#allocation4], 1
    %868 = vsyncpa %s867, 1
    %869 = vsyncpa [#allocation12], 1
    %s870 = scalar_lea.sflag [#allocation12], 1
    %871 = vsyncpa %s870, 1

</llo_original>
